<compile_context>
chip_gen: v5e
topology: v5e:2x2
jax: 0.10.0
libtpu: 0.0.40
codegen_flags: <defaults>
</compile_context>

<pallas_src>
import jax
import jax.numpy as jnp
from jax.experimental import pallas as pl
from jax.experimental.pallas import tpu as pltpu


def _hbm_copy_kernel(x_hbm, o_hbm, sem):
    # Single long HBM->HBM DMA descriptor: the DMA engine streams the whole
    # array at (close to) the HBM roofline, with zero VMEM staging and zero
    # per-tile pipeline overhead.
    cp = pltpu.make_async_copy(x_hbm, o_hbm, sem)
    cp.start()
    cp.wait()


def _materialize_copy(x2: jax.Array) -> jax.Array:
    """Identity copy of an already-squeezed array via one HBM->HBM DMA."""
    nbytes = x2.size * jnp.dtype(x2.dtype).itemsize
    return pl.pallas_call(
        _hbm_copy_kernel,
        out_shape=jax.ShapeDtypeStruct(x2.shape, x2.dtype),
        in_specs=[pl.BlockSpec(memory_space=pl.ANY)],
        out_specs=pl.BlockSpec(memory_space=pl.ANY),
        scratch_shapes=[pltpu.SemaphoreType.DMA(())],
        cost_estimate=pl.CostEstimate(
            flops=0, transcendentals=0, bytes_accessed=2 * nbytes),
    )(x2)


def squeeze(x: jax.Array, dim: int = -1, *, materialize: bool = False) -> jax.Array:
    """Pallas/JAX equivalent of torch.Tensor.squeeze(dim=dim).

    Default is the zero-cost metadata reshape (view semantics).  Pass
    `materialize=True` only if a freshly allocated output buffer is required;
    that path runs a single HBM->HBM DMA Pallas kernel.
    """
    nd = x.ndim
    if nd == 0:
        # torch allows dim in {-1, 0} on a 0-d tensor; squeeze is a no-op.
        if dim not in (-1, 0):
            raise IndexError(
                f"Dimension out of range (expected to be in range of [-1, 0], but got {dim})")
        return x
    if not (-nd <= dim < nd):
        raise IndexError(
            f"Dimension out of range (expected to be in range of [{-nd}, {nd - 1}], "
            f"but got {dim})")
    d = dim if dim >= 0 else dim + nd

    if x.shape[d] != 1:
        # torch semantics: squeeze(dim) is a no-op view when that dim != 1.
        return x

    out_shape = x.shape[:d] + x.shape[d + 1:]

    # Fast path (default): squeeze is a pure metadata reshape — zero HBM traffic.
    if not materialize or x.size == 0 or len(out_shape) == 0:
        return jnp.reshape(x, out_shape)

    # Materializing path: metadata-reshape first (free), then one HBM->HBM DMA.
    x2 = jnp.reshape(x, out_shape)
    return _materialize_copy(x2)


if __name__ == "__main__":
    key = jax.random.PRNGKey(0)

    # Typical IQL usage: value/critic head output with a trailing singleton
    # axis, e.g. (batch, seq, hidden, 1) -> squeeze(-1).
    x = jax.random.normal(key, (2, 4, 16, 1), dtype=jnp.float32)
    ref = jnp.squeeze(x, axis=-1)

    # Default (view) path: zero-cost metadata reshape.
    y = squeeze(x, dim=-1)
    jax.block_until_ready(y)
    assert y.shape == (2, 4, 16), y.shape
    assert y.dtype == x.dtype
    assert bool(jnp.allclose(y, ref))

    # Explicit materializing path: Pallas HBM->HBM DMA copy kernel.
    ym = squeeze(x, dim=-1, materialize=True)
    jax.block_until_ready(ym)
    assert ym.shape == (2, 4, 16), ym.shape
    assert ym.dtype == x.dtype
    assert bool(jnp.allclose(ym, ref))

    # No-op case (dim size != 1) behaves like torch: same shape/values, no copy.
    x3 = jnp.reshape(x, (2, 4, 16))
    z = squeeze(x3, dim=-1, materialize=True)
    jax.block_until_ready(z)
    assert z.shape == (2, 4, 16)
    assert bool(jnp.allclose(z, x3))

    # Ragged small shape — full-array DMA handles any shape.
    a = jax.random.normal(jax.random.PRNGKey(1), (3, 5, 1), dtype=jnp.float32)
    ya = squeeze(a, dim=-1, materialize=True)
    jax.block_until_ready(ya)
    assert ya.shape == (3, 5)
    assert bool(jnp.allclose(ya, jnp.squeeze(a, axis=-1)))

    # bf16 case.
    c = jax.random.normal(jax.random.PRNGKey(3), (4, 16, 1)).astype(jnp.bfloat16)
    yc = squeeze(c, dim=-1, materialize=True)
    jax.block_until_ready(yc)
    assert yc.shape == (4, 16)
    assert yc.dtype == jnp.bfloat16
    assert bool(jnp.all(yc == jnp.squeeze(c, axis=-1)))

    # Squeeze of a middle singleton axis.
    m = jax.random.normal(jax.random.PRNGKey(4), (2, 1, 8, 16), dtype=jnp.float32)
    ymid = squeeze(m, dim=1, materialize=True)
    jax.block_until_ready(ymid)
    assert ymid.shape == (2, 8, 16)
    assert bool(jnp.allclose(ymid, jnp.squeeze(m, axis=1)))

    # Out-of-range dim raises IndexError (torch parity).
    try:
        squeeze(x3, dim=-5)
        raise AssertionError("expected IndexError for out-of-range dim")
    except IndexError:
        pass

    print("KERNEL_OK")
</pallas_src>

<mosaic_0001>
module attributes {stable_mosaic.version = 11 : i64} {
  func.func @_hbm_copy_kernel(%arg0: memref<2x4x16xf32, #tpu.memory_space<any>>, %arg1: memref<2x4x16xf32, #tpu.memory_space<any>>, %arg2: memref<!tpu.dma_semaphore, #tpu.memory_space<semaphore_mem>>) attributes {dimension_semantics = [], scalar_prefetch = 0 : i64, scratch_operands = 1 : i64, tpu.core_type = #tpu.core_type<tc>} {
    tpu.enqueue_dma source(%arg0 : memref<2x4x16xf32, #tpu.memory_space<any>>) target(%arg1 : memref<2x4x16xf32, #tpu.memory_space<any>>) target_semaphore(%arg2 : memref<!tpu.dma_semaphore, #tpu.memory_space<semaphore_mem>>)
    tpu.wait_dma2 semaphore(%arg2 : memref<!tpu.dma_semaphore, #tpu.memory_space<semaphore_mem>>) src(%arg0 : memref<2x4x16xf32, #tpu.memory_space<any>>) dst(%arg1 : memref<2x4x16xf32, #tpu.memory_space<any>>)
    return
  }
}

</mosaic_0001>

<llo_original>
// kernel: tpu_custom_call.1
$region0: #{tpu_custom_call.1}
  #allocation0 [shape = 'u32[]', space=smem, size = 0x4, offset = 0x4, fixed_abs, tag = 'smem constant byte address 0x4 - core index']
  #allocation1 [shape = 'u32[72,128]{1,0:T(1,128)}', space=vmem, size = 0x9000, scoped, tag = 'internal scratch']
  #allocation2 [shape = 's32[1]{0}', space=sflag, size = 0x4, scoped, tag = 'scratch operand']
  #allocation3 [shape = 's32[]', space=sflag, size = 0x4, offset = 0, fixed_abs, tag = 'sflag constant byte address 0x0 - dummy sync flag']
  #allocation4 [shape = 'u32[0]{0}', space=smem, size = 0, offset = 0, fixed_abs, tag = 'smem constant byte address 0x0 - null']
  %s0 = inlined_call_operand.hbm [shape: f32[2,4,16], index: 0, kind: input, shape index: {}]
  %s1 = inlined_call_operand.hbm [shape: f32[2,4,16], index: 1, kind: output, shape index: {}]
  %s2 = sld [smem:[#allocation0]]
  $region2: #{tpu_custom_call.1} parent=0
    _
  %s4 = ssub.s32 1, %s2
  %s5 = scalar_select 0, %s4, %s2
  %s7 = sshll.u32 1, 14
  %s8 = sxor.u32 4294967295, %s7
  %s10 = sshll.u32 %s0, 4
  %s11 = int_to_ptr.hbm [resolvable:$true] %s10
  %s12 = sshll.u32 %s1, 4
  %s13 = int_to_ptr.hbm [resolvable:$true] %s12
  %16 = dma.general %s11, 128, %s13, [#allocation2], [#allocation3], [#allocation4], 0, 0
  %s17 = smul.u32 2, 4
  %s18 = smul.u32 %s17, 1
  %s19 = sshll.u32 %s18, 4
  %20 = dma.done [#allocation2], %s19
  %21 = vsyncmov [#allocation2]
  %s22 = vpop.sfrf %21
  %p23 = scmp.eq.s32.totalorder %s22, 0
  %p24 = pneg %p23
  %26 = shalt.err (%p24)

</llo_original>
